<compile_context>
chip_gen: v7x
topology: tpu7x:2x2x1
jax: 0.10.0
libtpu: 0.0.40
codegen_flags: <defaults>
</compile_context>

<pallas_src>
import jax
import jax.numpy as jnp
from jax.experimental import pallas as pl
from jax.experimental.pallas import tpu as pltpu


def _pos_embed_kernel(x_ref, pe_ref, o_ref):
    # x_ref:  (TS, TB, E)
    # pe_ref: (TS, 1, E)   broadcast over the batch (sublane) dim
    # o_ref:  (TS, TB, E)
    o_ref[...] = x_ref[...] + pe_ref[...].astype(o_ref.dtype)


def _tile_budget():
    """Generation-aware (target block bytes, vmem_limit_bytes or None)."""
    try:
        kind = jax.devices()[0].device_kind.lower()
    except Exception:  # pragma: no cover - defensive
        kind = ""
    if "v7" in kind:
        # 3.2 TB/s HBM: ~6 MiB blocks keep the ~0.35 us per-step overhead
        # under ~7%.  Double-buffered x+out (~24 MiB) needs a raised scoped
        # VMEM limit (64 MiB physical on v7x).
        return 6 * 1024 * 1024, 40 * 1024 * 1024
    if "v6" in kind:
        # 32 MiB scoped-VMEM default comfortably fits 4 MiB blocks
        # double-buffered for x and out.
        return 4 * 1024 * 1024, None
    # v5e (16 MiB scoped-VMEM default) and unknown chips: stay conservative.
    return 2 * 1024 * 1024, None


def positional_embeddings(x, pe, *, donate_x=False):
    """Forward pass of PositionalEmbeddings.

    Args:
      x:  (S, B, E)        input sequence (seq-major, PyTorch convention).
      pe: (max_len, 1, E)  learned positional-embedding parameter, max_len >= S.
      donate_x: if True, alias x's HBM buffer to the output
        (input_output_aliases={0: 0}).  Only use when the caller no longer
        needs x.

    Returns:
      (S, B, E) array equal to x + pe[:S], in x.dtype.
    """
    S, B, E = x.shape
    dtype_bytes = jnp.dtype(x.dtype).itemsize
    pe_bytes = jnp.dtype(pe.dtype).itemsize

    target_bytes, vmem_limit = _tile_budget()

    # ---- Batch tile -------------------------------------------------------
    # Only split batch when a single (1, B, E) row already exceeds the block
    # budget (keeps the kernel valid/pipelined at any shape, esp. on v7x).
    if B * E * dtype_bytes > target_bytes:
        TB = max(1, target_bytes // (E * dtype_bytes))
        if TB >= 8:
            TB = (TB // 8) * 8      # keep the sublane dim 8-aligned
        TB = int(min(B, TB))
    else:
        TB = B

    # ---- Sequence tile ----------------------------------------------------
    rows = max(1, target_bytes // (TB * E * dtype_bytes))
    if rows >= 8:
        rows = (rows // 8) * 8
    TS = int(min(S, rows))

    # Ensure >= 2 sequence blocks (when S is non-trivial) so v7x's two
    # TensorCores both get work under "parallel" semantics.  Round up to a
    # multiple of 8 to keep exactly 2 blocks and a small tail.
    if TS >= S and S >= 16:
        half = pl.cdiv(S, 2)
        if half >= 8:
            half = ((half + 7) // 8) * 8
        TS = int(min(TS, half))

    grid = (pl.cdiv(S, TS), pl.cdiv(B, TB))

    cost = pl.CostEstimate(
        flops=S * B * E,
        bytes_accessed=2 * S * B * E * dtype_bytes + S * E * pe_bytes,
        transcendentals=0,
    )

    cp_kwargs = dict(dimension_semantics=("parallel", "parallel"))
    if vmem_limit is not None:
        cp_kwargs["vmem_limit_bytes"] = vmem_limit

    return pl.pallas_call(
        _pos_embed_kernel,
        out_shape=jax.ShapeDtypeStruct((S, B, E), x.dtype),
        grid=grid,
        in_specs=[
            # x: tiled over (seq, batch); embed kept whole (lane-dense for
            # real CLIP embed sizes, which are multiples of 128).
            pl.BlockSpec((TS, TB, E), lambda i, j: (i, j, 0)),
            # pe: full parameter passed; index_map picks the sequence block
            # aligned with x and ignores the batch grid index.  Rows fetched
            # past S in the final partial block only feed padded output rows
            # that are discarded, so this is correct.
            pl.BlockSpec((TS, 1, E), lambda i, j: (i, 0, 0)),
        ],
        out_specs=pl.BlockSpec((TS, TB, E), lambda i, j: (i, j, 0)),
        compiler_params=pltpu.CompilerParams(**cp_kwargs),
        cost_estimate=cost,
        input_output_aliases=({0: 0} if donate_x else {}),
    )(x, pe)


def _reference(x, pe):
    """Pure-JAX reference of the PyTorch forward."""
    return x + pe[: x.shape[0]].astype(x.dtype)


if __name__ == "__main__":
    # Small shapes consistent with the module: seq=8, batch=2, embed=32.
    S, B, E = 8, 2, 32
    max_len = 10000

    key = jax.random.PRNGKey(0)
    kx, kp = jax.random.split(key, 2)

    x = jax.random.normal(kx, (S, B, E), dtype=jnp.float32)
    # The nn.Parameter is initialized to zeros in PyTorch but is trainable;
    # use random values so the add is actually exercised.
    pe = jax.random.normal(kp, (max_len, 1, E), dtype=jnp.float32) * 0.02

    out = positional_embeddings(x, pe)
    out = jax.block_until_ready(out)

    assert out.shape == (S, B, E), out.shape

    ref = _reference(x, pe)
    assert jnp.allclose(out, ref, atol=1e-6, rtol=1e-6), (
        float(jnp.max(jnp.abs(out - ref)))
    )

    print("KERNEL_OK")
</pallas_src>

<mosaic_0001>
module attributes {stable_mosaic.version = 11 : i64} {
  func.func @_pos_embed_kernel(%arg0: i32, %arg1: i32, %arg2: memref<8x2x32xf32, #tpu.memory_space<vmem>>, %arg3: memref<8x1x32xf32, #tpu.memory_space<vmem>>, %arg4: memref<8x2x32xf32, #tpu.memory_space<vmem>>) attributes {dimension_semantics = [#tpu.dimension_semantics<parallel>, #tpu.dimension_semantics<parallel>], iteration_bounds = array<i64: 1, 1>, scalar_prefetch = 0 : i64, scratch_operands = 0 : i64, tpu.core_type = #tpu.core_type<tc>, window_params = [{transform_indices = @transform_0, window_bounds = array<i64: 8, 2, 32>}, {transform_indices = @transform_1, window_bounds = array<i64: 8, 1, 32>}, {transform_indices = @transform_2, window_bounds = array<i64: 8, 2, 32>}]} {
    %c0 = arith.constant 0 : index
    %c0_0 = arith.constant 0 : index
    %c0_1 = arith.constant 0 : index
    %0 = vector.load %arg2[%c0, %c0_0, %c0_1] : memref<8x2x32xf32, #tpu.memory_space<vmem>>, vector<8x2x32xf32>
    %c0_2 = arith.constant 0 : index
    %c0_3 = arith.constant 0 : index
    %c0_4 = arith.constant 0 : index
    %1 = vector.load %arg3[%c0_2, %c0_3, %c0_4] : memref<8x1x32xf32, #tpu.memory_space<vmem>>, vector<8x1x32xf32>
    %2 = vector.broadcast %1 : vector<8x1x32xf32> to vector<8x2x32xf32>
    %3 = arith.addf %0, %2 : vector<8x2x32xf32>
    %c0_5 = arith.constant 0 : index
    %c0_6 = arith.constant 0 : index
    %c0_7 = arith.constant 0 : index
    %4 = vector.load %arg4[%c0_5, %c0_6, %c0_7] : memref<8x2x32xf32, #tpu.memory_space<vmem>>, vector<8x2x32xf32>
    tpu.vector_store %arg4[%c0_5, %c0_6, %c0_7], %3 {strides = array<i32>} : memref<8x2x32xf32, #tpu.memory_space<vmem>>, vector<8x2x32xf32>,
    return
  }
  func.func @transform_0(%arg0: i32, %arg1: i32) -> (i32, i32, i32) {
    %c0_i32 = arith.constant 0 : i32
    %c0_i32_0 = arith.constant 0 : i32
    return %arg0, %arg1, %c0_i32 : i32, i32, i32
  }
  func.func @transform_1(%arg0: i32, %arg1: i32) -> (i32, i32, i32) {
    %c0_i32 = arith.constant 0 : i32
    %c0_i32_0 = arith.constant 0 : i32
    %c0_i32_1 = arith.constant 0 : i32
    return %arg0, %c0_i32, %c0_i32_0 : i32, i32, i32
  }
  func.func @transform_2(%arg0: i32, %arg1: i32) -> (i32, i32, i32) {
    %c0_i32 = arith.constant 0 : i32
    %c0_i32_0 = arith.constant 0 : i32
    return %arg0, %arg1, %c0_i32 : i32, i32, i32
  }
}

</mosaic_0001>

<llo_original>
// kernel: tpu_custom_call.1
$region0: #{tpu_custom_call.1}
  #allocation0 [shape = 'u32[]', space=smem, size = 0x4, offset = 0x4, fixed_abs, tag = 'smem constant byte address 0x4 - core index']
  #allocation1 [shape = 'u32[144,128]{1,0:T(1,128)}', space=vmem, size = 0x12000, scoped, tag = 'internal scratch']
  %s0 = inlined_call_operand.vmem [shape: f32[8,2,32], index: 0, kind: input, shape index: {}]
  %s1 = inlined_call_operand.vmem [shape: f32[10000,1,32], index: 1, kind: input, shape index: {}]
  %s2 = inlined_call_operand.hbm [shape: f32[8,2,32], index: 2, kind: output, shape index: {}]
  %s3 = sld [smem:[#allocation0]]
  $region18: #{tpu_custom_call.1} parent=0
    _
  %s5 = ssub.s32 1, %s3
  %s6 = scalar_select 0, %s5, %s3
  $region1: #{tpu_custom_call.1} parent=0
    #allocation2 [shape = 'u8[8192]{0}', space=vmem, size = 0x2000, scoped, tag = 'output window, operand 0, single buffered']
    #allocation3 [shape = 's32[1]{0}', space=sflag, size = 0x4, scoped, tag = 'scoped memory for tpu_custom_call.1']
    %7 = vsyncpa [#allocation3], 0
    // Predicated region
    $region2: #{tpu_custom_call.1} parent=1 // pred_check
      _
    $region3: #{tpu_custom_call.1} parent=1 // pred_check_branch
      %9 = sbr.rel (0) target = $region5
    $region4: #{tpu_custom_call.1} parent=1 // pred_region
      _
    $region5: #{tpu_custom_call.1} parent=1 // pred_fallthru
      _
    // Predicated region
    $region6: #{tpu_custom_call.1} parent=1 // pred_check
      _
    $region7: #{tpu_custom_call.1} parent=1 // pred_check_branch
      %11 = sbr.rel (0) target = $region9
    $region8: #{tpu_custom_call.1} parent=1 // pred_region
      _
    $region9: #{tpu_custom_call.1} parent=1 // pred_fallthru
      _
    %v12 = vld [vmem:[%s0] sm:$0x3]
    %v13 = vld [vmem:[%s0 + $0x2] sm:$0x3]
    %v14 = vld [vmem:[%s0 + $0x4] sm:$0x3]
    %v15 = vld [vmem:[%s0 + $0x6] sm:$0x3]
    %v16 = vld [vmem:[%s0 + $0x8] sm:$0x3]
    %v17 = vld [vmem:[%s0 + $0xa] sm:$0x3]
    %v18 = vld [vmem:[%s0 + $0xc] sm:$0x3]
    %v19 = vld [vmem:[%s0 + $0xe] sm:$0x3]
    %v20 = vld [vmem:[%s1] sm:$0x1]
    %v21 = vld [vmem:[%s1 + $0x1] sm:$0x1]
    %v22 = vld [vmem:[%s1 + $0x2] sm:$0x1]
    %v23 = vld [vmem:[%s1 + $0x3] sm:$0x1]
    %v24 = vld [vmem:[%s1 + $0x4] sm:$0x1]
    %v25 = vld [vmem:[%s1 + $0x5] sm:$0x1]
    %v26 = vld [vmem:[%s1 + $0x6] sm:$0x1]
    %v27 = vld [vmem:[%s1 + $0x7] sm:$0x1]
    %v36 = vlaneseq
    %v37 = vshrl.u32 %v36, 7
    %v38 = vsub.s32 0, %v37
    %v39 = vrot.slane %v20, %v38
    %v40 = vlaneseq
    %v41 = vshrl.u32 %v40, 7
    %v42 = vsub.s32 0, %v41
    %v43 = vrot.slane %v21, %v42
    %v44 = vlaneseq
    %v45 = vshrl.u32 %v44, 7
    %v46 = vsub.s32 0, %v45
    %v47 = vrot.slane %v22, %v46
    %v48 = vlaneseq
    %v49 = vshrl.u32 %v48, 7
    %v50 = vsub.s32 0, %v49
    %v51 = vrot.slane %v23, %v50
    %v52 = vlaneseq
    %v53 = vshrl.u32 %v52, 7
    %v54 = vsub.s32 0, %v53
    %v55 = vrot.slane %v24, %v54
    %v56 = vlaneseq
    %v57 = vshrl.u32 %v56, 7
    %v58 = vsub.s32 0, %v57
    %v59 = vrot.slane %v25, %v58
    %v60 = vlaneseq
    %v61 = vshrl.u32 %v60, 7
    %v62 = vsub.s32 0, %v61
    %v63 = vrot.slane %v26, %v62
    %v64 = vlaneseq
    %v65 = vshrl.u32 %v64, 7
    %v66 = vsub.s32 0, %v65
    %v67 = vrot.slane %v27, %v66
    %v76 = vadd.f32 %v12, %v39
    %v77 = vadd.f32 %v13, %v43
    %v78 = vadd.f32 %v14, %v47
    %v79 = vadd.f32 %v15, %v51
    %v80 = vadd.f32 %v16, %v55
    %v81 = vadd.f32 %v17, %v59
    %v82 = vadd.f32 %v18, %v63
    %v83 = vadd.f32 %v19, %v67
    %vm84 = vcmask 254976
    %85 = vst.msk [vmem:[#allocation2] sm:$0x3] %vm84, %v76
    %86 = vst.msk [vmem:[#allocation2 + $0x2] sm:$0x3] %vm84, %v77
    %87 = vst.msk [vmem:[#allocation2 + $0x4] sm:$0x3] %vm84, %v78
    %88 = vst.msk [vmem:[#allocation2 + $0x6] sm:$0x3] %vm84, %v79
    %89 = vst.msk [vmem:[#allocation2 + $0x8] sm:$0x3] %vm84, %v80
    %90 = vst.msk [vmem:[#allocation2 + $0xa] sm:$0x3] %vm84, %v81
    %91 = vst.msk [vmem:[#allocation2 + $0xc] sm:$0x3] %vm84, %v82
    %92 = vst.msk [vmem:[#allocation2 + $0xe] sm:$0x3] %vm84, %v83
    // Predicated region
    $region10: #{tpu_custom_call.1} parent=1 // pred_check
      _
    $region11: #{tpu_custom_call.1} parent=1 // pred_check_branch
      %94 = sbr.rel (0) target = $region13
    $region12: #{tpu_custom_call.1} parent=1 // pred_region
      %s96 = ssub.s32 256, 256
      %97 = vsyncadd [#allocation3], %s96
      %s98 = sshll.u32 [#allocation2], 4
      %s99 = int_to_ptr.vmem [resolvable:$true] %s98
      %104 = dma.vmem_to_hbm [thread:$0]  %s99, 256, %s2, [#allocation3], 32, 32, 2
    $region13: #{tpu_custom_call.1} parent=1 // pred_fallthru
      _
    // Predicated region
    $region14: #{tpu_custom_call.1} parent=1 // pred_check
      _
    $region15: #{tpu_custom_call.1} parent=1 // pred_check_branch
      %106 = sbr.rel (0) target = $region17
    $region16: #{tpu_custom_call.1} parent=1 // pred_region
      %107 = dma.done [#allocation3], 256
    $region17: #{tpu_custom_call.1} parent=1 // pred_fallthru
      _
    %108 = vsyncpa [#allocation3], 1

</llo_original>
